<compile_context>
chip_gen: v7x
topology: tpu7x:2x2x1
jax: 0.10.0
libtpu: 0.0.40
codegen_flags: <defaults>
</compile_context>

<pallas_src>
import math

import jax
import jax.numpy as jnp
from jax.experimental import pallas as pl
from jax.experimental.pallas import tpu as pltpu

# --- model config (small, BERT-like) ---
B = 2          # batch
S = 8          # sequence length
H = 32         # hidden size
NH = 4         # num attention heads
HD = H // NH   # head dim
NEG_INF = -1e12


def mhsa_kernel(x_ref, bias_ref, wqkv_ref, bqkv_ref, out_ref):
    # Single invocation: x_ref is the full [B*S, H] slab, bias_ref is
    # [B*S, B*S] (block-diagonal over batches + key mask, built in wrapper).
    x = x_ref[...]                                            # [B*S, H] f32

    # Fused QKV projection: one MXU matmul, one bias broadcast.
    # The query slice of wqkv/bqkv is pre-scaled by 1/sqrt(HD) in the wrapper.
    qkv = jnp.dot(x, wqkv_ref[...],
                  preferred_element_type=jnp.float32) + bqkv_ref[...]  # [B*S, 3H]

    bias = bias_ref[...]                                      # [B*S, B*S]

    ctx_parts = []
    for h in range(NH):                                       # static, NH=4
        lo, hi = h * HD, (h + 1) * HD
        q_h = qkv[:, lo:hi]                                   # [B*S, HD] (pre-scaled)
        k_h = qkv[:, H + lo:H + hi]                           # [B*S, HD]
        v_h = qkv[:, 2 * H + lo:2 * H + hi]                   # [B*S, HD]

        # Scores for ALL batches at once; cross-batch / masked entries get
        # -1e12 from the additive bias (=> exp underflows to exactly 0).
        s = jnp.dot(q_h, k_h.T,
                    preferred_element_type=jnp.float32) + bias  # [B*S, B*S]

        # Numerically stable softmax over keys (exact normalization;
        # approx reciprocal was not accurate enough for the tolerance).
        s = s - jnp.max(s, axis=-1, keepdims=True)
        p = jnp.exp(s)
        p = p / jnp.sum(p, axis=-1, keepdims=True)

        ctx_parts.append(jnp.dot(p, v_h, preferred_element_type=jnp.float32))

    ctx = jnp.concatenate(ctx_parts, axis=-1)                 # [B*S, H]
    out_ref[...] = ctx.astype(out_ref.dtype)


def mhsa(x, mask, params):
    """x: [B,S,H] f32; mask: [B,1,S] with 1.0 = keep, 0.0 = masked."""
    wq, bq, wk, bk, wv, bv = params

    # Fuse QKV weights/biases in the wrapper (one-time, tiny), folding the
    # 1/sqrt(HD) attention scale into the query projection.
    scale = 1.0 / math.sqrt(HD)
    wqkv = jnp.concatenate([wq * scale, wk, wv], axis=1)      # [H, 3H]
    bqkv = jnp.concatenate([bq * scale, bk, bv], axis=0).reshape(1, 3 * H)

    x2 = x.reshape(B * S, H)

    # Additive attention bias [B*S, B*S]:
    #   0        if same batch AND key not masked
    #   -1e12    otherwise (cross-batch block or v_mask == 0)
    row_batch = jnp.repeat(jnp.arange(B), S)                  # [B*S]
    key_keep = mask[:, 0, :].reshape(B * S)                   # [B*S]
    keep = (row_batch[:, None] == row_batch[None, :]) & (key_keep[None, :] != 0.0)
    bias = jnp.where(keep, 0.0, NEG_INF).astype(jnp.float32)  # [B*S, B*S]

    out2 = pl.pallas_call(
        mhsa_kernel,
        out_shape=jax.ShapeDtypeStruct((B * S, H), jnp.float32),
        in_specs=[
            pl.BlockSpec(memory_space=pltpu.MemorySpace.VMEM),   # x      [B*S, H]
            pl.BlockSpec(memory_space=pltpu.MemorySpace.VMEM),   # bias   [B*S, B*S]
            pl.BlockSpec(memory_space=pltpu.MemorySpace.VMEM),   # W_qkv  [H, 3H]
            pl.BlockSpec(memory_space=pltpu.MemorySpace.VMEM),   # b_qkv  [1, 3H]
        ],
        out_specs=pl.BlockSpec(memory_space=pltpu.MemorySpace.VMEM),
    )(x2, bias, wqkv, bqkv)

    return out2.reshape(B, S, H)


def mhsa_ref(x, mask, params):
    """Pure-JAX reference mirroring the PyTorch forward (dropout = identity)."""
    wq, bq, wk, bk, wv, bv = params
    q = x @ wq + bq
    k = x @ wk + bk
    v = x @ wv + bv

    def split(t):  # [B,S,H] -> [B,NH,S,HD]
        return t.reshape(B, S, NH, HD).transpose(0, 2, 1, 3)

    qh, kh, vh = split(q), split(k), split(v)
    scores = jnp.einsum("bnqd,bnkd->bnqk", qh, kh) / math.sqrt(HD)
    m = mask[:, None, :, :]                                   # [B,1,1,S]
    scores = jnp.where(m == 0.0, NEG_INF, scores)             # masked_fill
    probs = jax.nn.softmax(scores, axis=-1)
    ctx = jnp.einsum("bnqk,bnkd->bnqd", probs, vh)
    return ctx.transpose(0, 2, 1, 3).reshape(B, S, H)


if __name__ == "__main__":
    key = jax.random.PRNGKey(0)
    keys = jax.random.split(key, 8)

    x = jax.random.normal(keys[0], (B, S, H), dtype=jnp.float32)

    # attention mask [B, 1, S]: keep everything in batch 0, mask last 2 keys in batch 1
    mask = jnp.ones((B, 1, S), dtype=jnp.float32)
    mask = mask.at[1, 0, S - 2:].set(0.0)

    init = lambda k, shape: (0.02 * jax.random.normal(k, shape)).astype(jnp.float32)
    params = (
        init(keys[1], (H, H)), init(keys[4], (H,)),   # query W, b
        init(keys[2], (H, H)), init(keys[5], (H,)),   # key   W, b
        init(keys[3], (H, H)), init(keys[6], (H,)),   # value W, b
    )

    out = jax.block_until_ready(mhsa(x, mask, params))
    ref = mhsa_ref(x, mask, params)

    assert out.shape == (B, S, H)
    # f32 matmuls hit the MXU with default precision (bf16 passes); kernel and
    # XLA reference group/accumulate differently, so allow ~1e-3-level slack.
    # A real semantic bug would be orders of magnitude larger.
    assert jnp.allclose(out, ref, atol=2e-3, rtol=2e-3), "mismatch vs JAX reference"

    print("KERNEL_OK")
</pallas_src>

<mosaic_0001>
module attributes {stable_mosaic.version = 11 : i64} {
  func.func @mhsa_kernel(%arg0: memref<16x32xf32, #tpu.memory_space<vmem>>, %arg1: memref<16x16xf32, #tpu.memory_space<vmem>>, %arg2: memref<32x96xf32, #tpu.memory_space<vmem>>, %arg3: memref<1x96xf32, #tpu.memory_space<vmem>>, %arg4: memref<16x32xf32, #tpu.memory_space<vmem>>) attributes {dimension_semantics = [], scalar_prefetch = 0 : i64, scratch_operands = 0 : i64, tpu.core_type = #tpu.core_type<tc>} {
    %c0 = arith.constant 0 : index
    %c0_0 = arith.constant 0 : index
    %0 = vector.load %arg0[%c0, %c0_0] : memref<16x32xf32, #tpu.memory_space<vmem>>, vector<16x32xf32>
    %c0_1 = arith.constant 0 : index
    %c0_2 = arith.constant 0 : index
    %1 = vector.load %arg2[%c0_1, %c0_2] : memref<32x96xf32, #tpu.memory_space<vmem>>, vector<32x96xf32>
    %cst = arith.constant dense<0.000000e+00> : vector<16x96xf32>
    %2 = tpu.matmul %0, %1, %cst {dimension_numbers = #tpu.dot_dimension_numbers<[1], [0], [0], [1], [0, 0, 1, 1], [], []>} : vector<16x32xf32>, vector<32x96xf32>, vector<16x96xf32> -> vector<16x96xf32>
    %c0_3 = arith.constant 0 : index
    %c0_4 = arith.constant 0 : index
    %3 = vector.load %arg3[%c0_3, %c0_4] : memref<1x96xf32, #tpu.memory_space<vmem>>, vector<1x96xf32>
    %4 = vector.broadcast %3 : vector<1x96xf32> to vector<16x96xf32>
    %5 = arith.addf %2, %4 : vector<16x96xf32>
    %c0_5 = arith.constant 0 : index
    %c0_6 = arith.constant 0 : index
    %6 = vector.load %arg1[%c0_5, %c0_6] : memref<16x16xf32, #tpu.memory_space<vmem>>, vector<16x16xf32>
    %7 = vector.extract_strided_slice %5 {offsets = [0, 0], sizes = [16, 8], strides = [1, 1]} : vector<16x96xf32> to vector<16x8xf32>
    %8 = vector.extract_strided_slice %5 {offsets = [0, 32], sizes = [16, 8], strides = [1, 1]} : vector<16x96xf32> to vector<16x8xf32>
    %9 = vector.extract_strided_slice %5 {offsets = [0, 64], sizes = [16, 8], strides = [1, 1]} : vector<16x96xf32> to vector<16x8xf32>
    %10 = tpu.transpose %8, [1, 0] : vector<16x8xf32> -> vector<8x16xf32>
    %cst_7 = arith.constant dense<0.000000e+00> : vector<16x16xf32>
    %11 = tpu.matmul %7, %10, %cst_7 {dimension_numbers = #tpu.dot_dimension_numbers<[1], [0], [0], [1], [0, 0, 1, 1], [], []>} : vector<16x8xf32>, vector<8x16xf32>, vector<16x16xf32> -> vector<16x16xf32>
    %12 = arith.addf %11, %6 : vector<16x16xf32>
    %cst_8 = arith.constant dense<0xFF800000> : vector<16xf32>
    %13 = vector.multi_reduction <maximumf>, %12, %cst_8 [1] : vector<16x16xf32> to vector<16xf32>
    %14 = vector.shape_cast %13 : vector<16xf32> to vector<16x1xf32>
    %15 = vector.broadcast %14 : vector<16x1xf32> to vector<16x16xf32>
    %16 = arith.subf %12, %15 : vector<16x16xf32>
    %17 = math.exp %16 : vector<16x16xf32>
    %cst_9 = arith.constant dense<0.000000e+00> : vector<16xf32>
    %18 = vector.multi_reduction <add>, %17, %cst_9 [1] : vector<16x16xf32> to vector<16xf32>
    %19 = vector.shape_cast %18 : vector<16xf32> to vector<16x1xf32>
    %20 = vector.broadcast %19 : vector<16x1xf32> to vector<16x16xf32>
    %21 = arith.divf %17, %20 : vector<16x16xf32>
    %cst_10 = arith.constant dense<0.000000e+00> : vector<16x8xf32>
    %22 = tpu.matmul %21, %9, %cst_10 {dimension_numbers = #tpu.dot_dimension_numbers<[1], [0], [0], [1], [0, 0, 1, 1], [], []>} : vector<16x16xf32>, vector<16x8xf32>, vector<16x8xf32> -> vector<16x8xf32>
    %23 = vector.extract_strided_slice %5 {offsets = [0, 8], sizes = [16, 8], strides = [1, 1]} : vector<16x96xf32> to vector<16x8xf32>
    %24 = vector.extract_strided_slice %5 {offsets = [0, 40], sizes = [16, 8], strides = [1, 1]} : vector<16x96xf32> to vector<16x8xf32>
    %25 = vector.extract_strided_slice %5 {offsets = [0, 72], sizes = [16, 8], strides = [1, 1]} : vector<16x96xf32> to vector<16x8xf32>
    %26 = tpu.transpose %24, [1, 0] : vector<16x8xf32> -> vector<8x16xf32>
    %cst_11 = arith.constant dense<0.000000e+00> : vector<16x16xf32>
    %27 = tpu.matmul %23, %26, %cst_11 {dimension_numbers = #tpu.dot_dimension_numbers<[1], [0], [0], [1], [0, 0, 1, 1], [], []>} : vector<16x8xf32>, vector<8x16xf32>, vector<16x16xf32> -> vector<16x16xf32>
    %28 = arith.addf %27, %6 : vector<16x16xf32>
    %cst_12 = arith.constant dense<0xFF800000> : vector<16xf32>
    %29 = vector.multi_reduction <maximumf>, %28, %cst_12 [1] : vector<16x16xf32> to vector<16xf32>
    %30 = vector.shape_cast %29 : vector<16xf32> to vector<16x1xf32>
    %31 = vector.broadcast %30 : vector<16x1xf32> to vector<16x16xf32>
    %32 = arith.subf %28, %31 : vector<16x16xf32>
    %33 = math.exp %32 : vector<16x16xf32>
    %cst_13 = arith.constant dense<0.000000e+00> : vector<16xf32>
    %34 = vector.multi_reduction <add>, %33, %cst_13 [1] : vector<16x16xf32> to vector<16xf32>
    %35 = vector.shape_cast %34 : vector<16xf32> to vector<16x1xf32>
    %36 = vector.broadcast %35 : vector<16x1xf32> to vector<16x16xf32>
    %37 = arith.divf %33, %36 : vector<16x16xf32>
    %cst_14 = arith.constant dense<0.000000e+00> : vector<16x8xf32>
    %38 = tpu.matmul %37, %25, %cst_14 {dimension_numbers = #tpu.dot_dimension_numbers<[1], [0], [0], [1], [0, 0, 1, 1], [], []>} : vector<16x16xf32>, vector<16x8xf32>, vector<16x8xf32> -> vector<16x8xf32>
    %39 = vector.extract_strided_slice %5 {offsets = [0, 16], sizes = [16, 8], strides = [1, 1]} : vector<16x96xf32> to vector<16x8xf32>
    %40 = vector.extract_strided_slice %5 {offsets = [0, 48], sizes = [16, 8], strides = [1, 1]} : vector<16x96xf32> to vector<16x8xf32>
    %41 = vector.extract_strided_slice %5 {offsets = [0, 80], sizes = [16, 8], strides = [1, 1]} : vector<16x96xf32> to vector<16x8xf32>
    %42 = tpu.transpose %40, [1, 0] : vector<16x8xf32> -> vector<8x16xf32>
    %cst_15 = arith.constant dense<0.000000e+00> : vector<16x16xf32>
    %43 = tpu.matmul %39, %42, %cst_15 {dimension_numbers = #tpu.dot_dimension_numbers<[1], [0], [0], [1], [0, 0, 1, 1], [], []>} : vector<16x8xf32>, vector<8x16xf32>, vector<16x16xf32> -> vector<16x16xf32>
    %44 = arith.addf %43, %6 : vector<16x16xf32>
    %cst_16 = arith.constant dense<0xFF800000> : vector<16xf32>
    %45 = vector.multi_reduction <maximumf>, %44, %cst_16 [1] : vector<16x16xf32> to vector<16xf32>
    %46 = vector.shape_cast %45 : vector<16xf32> to vector<16x1xf32>
    %47 = vector.broadcast %46 : vector<16x1xf32> to vector<16x16xf32>
    %48 = arith.subf %44, %47 : vector<16x16xf32>
    %49 = math.exp %48 : vector<16x16xf32>
    %cst_17 = arith.constant dense<0.000000e+00> : vector<16xf32>
    %50 = vector.multi_reduction <add>, %49, %cst_17 [1] : vector<16x16xf32> to vector<16xf32>
    %51 = vector.shape_cast %50 : vector<16xf32> to vector<16x1xf32>
    %52 = vector.broadcast %51 : vector<16x1xf32> to vector<16x16xf32>
    %53 = arith.divf %49, %52 : vector<16x16xf32>
    %cst_18 = arith.constant dense<0.000000e+00> : vector<16x8xf32>
    %54 = tpu.matmul %53, %41, %cst_18 {dimension_numbers = #tpu.dot_dimension_numbers<[1], [0], [0], [1], [0, 0, 1, 1], [], []>} : vector<16x16xf32>, vector<16x8xf32>, vector<16x8xf32> -> vector<16x8xf32>
    %55 = vector.extract_strided_slice %5 {offsets = [0, 24], sizes = [16, 8], strides = [1, 1]} : vector<16x96xf32> to vector<16x8xf32>
    %56 = vector.extract_strided_slice %5 {offsets = [0, 56], sizes = [16, 8], strides = [1, 1]} : vector<16x96xf32> to vector<16x8xf32>
    %57 = vector.extract_strided_slice %5 {offsets = [0, 88], sizes = [16, 8], strides = [1, 1]} : vector<16x96xf32> to vector<16x8xf32>
    %58 = tpu.transpose %56, [1, 0] : vector<16x8xf32> -> vector<8x16xf32>
    %cst_19 = arith.constant dense<0.000000e+00> : vector<16x16xf32>
    %59 = tpu.matmul %55, %58, %cst_19 {dimension_numbers = #tpu.dot_dimension_numbers<[1], [0], [0], [1], [0, 0, 1, 1], [], []>} : vector<16x8xf32>, vector<8x16xf32>, vector<16x16xf32> -> vector<16x16xf32>
    %60 = arith.addf %59, %6 : vector<16x16xf32>
    %cst_20 = arith.constant dense<0xFF800000> : vector<16xf32>
    %61 = vector.multi_reduction <maximumf>, %60, %cst_20 [1] : vector<16x16xf32> to vector<16xf32>
    %62 = vector.shape_cast %61 : vector<16xf32> to vector<16x1xf32>
    %63 = vector.broadcast %62 : vector<16x1xf32> to vector<16x16xf32>
    %64 = arith.subf %60, %63 : vector<16x16xf32>
    %65 = math.exp %64 : vector<16x16xf32>
    %cst_21 = arith.constant dense<0.000000e+00> : vector<16xf32>
    %66 = vector.multi_reduction <add>, %65, %cst_21 [1] : vector<16x16xf32> to vector<16xf32>
    %67 = vector.shape_cast %66 : vector<16xf32> to vector<16x1xf32>
    %68 = vector.broadcast %67 : vector<16x1xf32> to vector<16x16xf32>
    %69 = arith.divf %65, %68 : vector<16x16xf32>
    %cst_22 = arith.constant dense<0.000000e+00> : vector<16x8xf32>
    %70 = tpu.matmul %69, %57, %cst_22 {dimension_numbers = #tpu.dot_dimension_numbers<[1], [0], [0], [1], [0, 0, 1, 1], [], []>} : vector<16x16xf32>, vector<16x8xf32>, vector<16x8xf32> -> vector<16x8xf32>
    %71 = tpu.concatenate %22, %38, %54, %70 in 1 : vector<16x8xf32>, vector<16x8xf32>, vector<16x8xf32>, vector<16x8xf32> -> vector<16x32xf32>
    %c0_23 = arith.constant 0 : index
    %c0_24 = arith.constant 0 : index
    %72 = vector.load %arg4[%c0_23, %c0_24] : memref<16x32xf32, #tpu.memory_space<vmem>>, vector<16x32xf32>
    tpu.vector_store %arg4[%c0_23, %c0_24], %71 {strides = array<i32>} : memref<16x32xf32, #tpu.memory_space<vmem>>, vector<16x32xf32>,
    return
  }
}

</mosaic_0001>

<llo_original>
// kernel: tpu_custom_call.1
$region0: #{tpu_custom_call.1}
  #allocation0 [shape = 'u32[]', space=smem, size = 0x4, offset = 0x4, fixed_abs, tag = 'smem constant byte address 0x4 - core index']
  #allocation1 [shape = 'u32[144,128]{1,0:T(1,128)}', space=vmem, size = 0x12000, scoped, tag = 'internal scratch']
  %s0 = inlined_call_operand.hbm [shape: f32[16,32], index: 0, kind: input, shape index: {}]
  %s1 = inlined_call_operand.hbm [shape: f32[16,16], index: 1, kind: input, shape index: {}]
  %s2 = inlined_call_operand.hbm [shape: f32[32,96], index: 2, kind: input, shape index: {}]
  %s3 = inlined_call_operand.vmem [shape: f32[1,96], index: 3, kind: input, shape index: {}]
  %s4 = inlined_call_operand.hbm [shape: f32[16,32], index: 4, kind: output, shape index: {}]
  %s5 = sld [smem:[#allocation0]]
  $region38: #{tpu_custom_call.1} parent=0
    _
  %s7 = ssub.s32 1, %s5
  %s8 = scalar_select 0, %s7, %s5
  $region1: #{tpu_custom_call.1} parent=0
    #allocation2 [shape = 'u8[8192]{0}', space=vmem, size = 0x2000, scoped, tag = 'input window, operand 0, single buffered']
    #allocation3 [shape = 's32[1]{0}', space=sflag, size = 0x4, scoped, tag = 'scoped memory for tpu_custom_call.1']
    #allocation4 [shape = 's32[1]{0}', space=sflag, size = 0x4, scoped, tag = 'scoped memory for tpu_custom_call.1']
    #allocation5 [shape = 'u8[8192]{0}', space=vmem, size = 0x2000, scoped, tag = 'input window, operand 1, single buffered']
    #allocation6 [shape = 's32[1]{0}', space=sflag, size = 0x4, scoped, tag = 'scoped memory for tpu_custom_call.1']
    #allocation7 [shape = 'u8[16384]{0}', space=vmem, size = 0x4000, scoped, tag = 'input window, operand 2, single buffered']
    #allocation8 [shape = 'u8[8192]{0}', space=vmem, size = 0x2000, scoped, tag = 'output window, operand 0, single buffered']
    %9 = vsyncpa [#allocation3], 0
    %10 = vsyncpa [#allocation6], 0
    %11 = vsyncpa [#allocation4], 0
    // Predicated region
    $region2: #{tpu_custom_call.1} parent=1 // pred_check
      _
    $region3: #{tpu_custom_call.1} parent=1 // pred_check_branch
      %13 = sbr.rel (0) target = $region5
    $region4: #{tpu_custom_call.1} parent=1 // pred_region
      %s15 = ssub.s32 256, 256
      %16 = vsyncadd [#allocation3], %s15
      %s17 = sshll.u32 [#allocation2], 4
      %s18 = int_to_ptr.vmem [resolvable:$true] %s17
      %23 = dma.hbm_to_vmem [thread:$0]  %s0, 256, %s18, [#allocation3], 128, 128, 8
    $region5: #{tpu_custom_call.1} parent=1 // pred_fallthru
      _
    // Predicated region
    $region6: #{tpu_custom_call.1} parent=1 // pred_check
      _
    $region7: #{tpu_custom_call.1} parent=1 // pred_check_branch
      %25 = sbr.rel (0) target = $region9
    $region8: #{tpu_custom_call.1} parent=1 // pred_region
      %s27 = ssub.s32 256, 256
      %28 = vsyncadd [#allocation6], %s27
      %s29 = sshll.u32 [#allocation5], 4
      %s30 = int_to_ptr.vmem [resolvable:$true] %s29
      %35 = dma.hbm_to_vmem [thread:$0]  %s1, 256, %s30, [#allocation6], 128, 128, 8
    $region9: #{tpu_custom_call.1} parent=1 // pred_fallthru
      _
    // Predicated region
    $region10: #{tpu_custom_call.1} parent=1 // pred_check
      _
    $region11: #{tpu_custom_call.1} parent=1 // pred_check_branch
      %37 = sbr.rel (0) target = $region13
    $region12: #{tpu_custom_call.1} parent=1 // pred_region
      %s39 = ssub.s32 512, 512
      %40 = vsyncadd [#allocation6], %s39
      %s41 = sshll.u32 [#allocation7], 4
      %s42 = int_to_ptr.vmem [resolvable:$true] %s41
      %47 = dma.hbm_to_vmem [thread:$0]  %s2, 512, %s42, [#allocation6], 128, 128, 8
    $region13: #{tpu_custom_call.1} parent=1 // pred_fallthru
      _
    // Predicated region
    $region14: #{tpu_custom_call.1} parent=1 // pred_check
      _
    $region15: #{tpu_custom_call.1} parent=1 // pred_check_branch
      %49 = sbr.rel (0) target = $region17
    $region16: #{tpu_custom_call.1} parent=1 // pred_region
      _
    $region17: #{tpu_custom_call.1} parent=1 // pred_fallthru
      _
    // Predicated region
    $region18: #{tpu_custom_call.1} parent=1 // pred_check
      _
    $region19: #{tpu_custom_call.1} parent=1 // pred_check_branch
      %51 = sbr.rel (0) target = $region21
    $region20: #{tpu_custom_call.1} parent=1 // pred_region
      %52 = dma.done [#allocation3], 256
    $region21: #{tpu_custom_call.1} parent=1 // pred_fallthru
      _
    // Predicated region
    $region22: #{tpu_custom_call.1} parent=1 // pred_check
      _
    $region23: #{tpu_custom_call.1} parent=1 // pred_check_branch
      %54 = sbr.rel (0) target = $region25
    $region24: #{tpu_custom_call.1} parent=1 // pred_region
      %55 = dma.done [#allocation6], 256
    $region25: #{tpu_custom_call.1} parent=1 // pred_fallthru
      _
    // Predicated region
    $region26: #{tpu_custom_call.1} parent=1 // pred_check
      _
    $region27: #{tpu_custom_call.1} parent=1 // pred_check_branch
      %57 = sbr.rel (0) target = $region29
    $region28: #{tpu_custom_call.1} parent=1 // pred_region
      %58 = dma.done [#allocation6], 512
    $region29: #{tpu_custom_call.1} parent=1 // pred_fallthru
      _
    %v59 = vld [vmem:[#allocation2] sm:$0xff]
    %v60 = vld [vmem:[#allocation2 + $0x8] sm:$0xff]
    %v61 = vld [vmem:[#allocation7] sm:$0xff]
    %v62 = vld [vmem:[#allocation7 + $0x8] sm:$0xff]
    %v63 = vld [vmem:[#allocation7 + $0x10] sm:$0xff]
    %v64 = vld [vmem:[#allocation7 + $0x18] sm:$0xff]
    %v65 = vld [vmem:[%s3] sm:$0x1]
    %v67 = vlaneseq
    %v68 = vshrl.u32 %v67, 7
    %v69 = vsub.s32 0, %v68
    %v70 = vrot.slane %v65, %v69
    %vm72 = vcmask 261120
    %v74 = vsel %vm72, %v59, 0
    %v77 = vsel %vm72, %v60, 0
    %79 = vmatprep.subr.mxu0 0.0
    %80 = vmatpush1.msra.mxu0 %v61
    %81 = vmatprep.subr.mxu0 0.0
    %82 = vmatpush1.msra.mxu0 %v62
    %83 = vmatprep.subr.mxu0 0.0
    %84 = vmatpush1.msra.mxu0 %v63
    %85 = vmatprep.subr.mxu0 0.0
    %86 = vmatpush1.msra.mxu0 %v64
    %87 = vmatprep.subr.mxu0 0.0
    %88 = vmatpush1.msra.mxu0 0.0
    %89 = vmatprep.subr.mxu0 0.0
    %90 = vmatpush1.msra.mxu0 0.0
    %91 = vmatprep.subr.mxu0 0.0
    %92 = vmatpush1.msra.mxu0 0.0
    %93 = vmatprep.subr.mxu0 0.0
    %94 = vmatpush1.msra.mxu0 0.0
    %95 = vmatprep.subr.mxu0 0.0
    %96 = vmatpush1.msra.mxu0 0.0
    %97 = vmatprep.subr.mxu0 0.0
    %98 = vmatpush1.msra.mxu0 0.0
    %99 = vmatprep.subr.mxu0 0.0
    %100 = vmatpush1.msra.mxu0 0.0
    %101 = vmatprep.subr.mxu0 0.0
    %102 = vmatpush1.msra.mxu0 0.0
    %103 = vmatprep.subr.mxu0 0.0
    %104 = vmatpush1.msra.mxu0 0.0
    %105 = vmatprep.subr.mxu0 0.0
    %106 = vmatpush1.msra.mxu0 0.0
    %107 = vmatprep.subr.mxu0 0.0
    %108 = vmatpush1.msra.mxu0 0.0
    %109 = vmatprep.subr.mxu0 0.0
    %110 = vmatpush1.msra.mxu0 0.0
    %111 = vmatprep.subr.mxu0 0.0
    %112 = vmatpush1.msra.mxu0 0.0
    %113 = vmatprep.subr.mxu0 0.0
    %114 = vmatpush1.msra.mxu0 0.0
    %115 = vmatprep.subr.mxu0 0.0
    %116 = vmatpush1.msra.mxu0 0.0
    %117 = vmatprep.subr.mxu0 0.0
    %118 = vmatpush1.msra.mxu0 0.0
    %119 = vmatprep.subr.mxu0 0.0
    %120 = vmatpush1.msra.mxu0 0.0
    %121 = vmatprep.subr.mxu0 0.0
    %122 = vmatpush1.msra.mxu0 0.0
    %123 = vmatprep.subr.mxu0 0.0
    %124 = vmatpush1.msra.mxu0 0.0
    %125 = vmatprep.subr.mxu0 0.0
    %126 = vmatpush1.msra.mxu0 0.0
    %127 = vmatprep.subr.mxu0 0.0
    %128 = vmatpush1.msra.mxu0 0.0
    %129 = vmatprep.subr.mxu0 0.0
    %130 = vmatpush1.msra.mxu0 0.0
    %131 = vmatprep.subr.mxu0 0.0
    %132 = vmatpush1.msra.mxu0 0.0
    %133 = vmatprep.subr.mxu0 0.0
    %134 = vmatpush1.msra.mxu0 0.0
    %135 = vmatprep.subr.mxu0 0.0
    %136 = vmatpush1.msra.mxu0 0.0
    %137 = vmatprep.subr.mxu0 0.0
    %138 = vmatpush1.msra.mxu0 0.0
    %139 = vmatprep.subr.mxu0 0.0
    %140 = vmatpush1.msra.mxu0 0.0
    %141 = vmatprep.subr.mxu0 0.0
    %142 = vmatpush1.msra.mxu0 0.0
    %143 = vmatprep.mubr.f32.mxu0 0.0
    %144 = vmatmul.mubr.f32.gmra.mrb[0].mxu0 %v74
    %v145 = vpop.f32.mrb[0].mxu0
    %v146 = vadd.f32 %v70, %v145
    %v147 = vpop.f32.mrb[0].mxu0
    %148 = vmatprep.mubr.f32.mxu0 0.0
    %149 = vmatmul.mubr.f32.gmra.mrb[0].mxu0 %v77
    %v150 = vpop.f32.mrb[0].mxu0
    %v151 = vadd.f32 %v70, %v150
    %v152 = vpop.f32.mrb[0].mxu0
    %153 = vdwg.mxu0
    %v154 = vld [vmem:[#allocation5] sm:$0xff]
    %v155 = vld [vmem:[#allocation5 + $0x8] sm:$0xff]
    %158 = vrot.lane.b32.xlu0 %v146, 96
    %v159 = vpop.permute.xlu0 %158
    %160 = vrot.lane.b32.xlu0 %v151, 96
    %v161 = vpop.permute.xlu0 %160
    %vm162 = vcmask 64512
    %v163 = vsel %vm162, %v146, 0
    %v165 = vsel %vm162, %v151, 0
    %v167 = vsel %vm162, %v159, 0
    %v169 = vsel %vm162, %v161, 0
    %171 = vmatprep.subr.mxu0 0.0
    %172 = vmatpush1.xpose.msra.mxu0 %v167
    %173 = vmatprep.subr.mxu0 0.0
    %174 = vmatpush1.xpose.msra.mxu0 %v169
    %175 = vmatprep.subr.mxu0 0.0
    %176 = vmatpush1.xpose.msra.mxu0 0.0
    %177 = vmatprep.subr.mxu0 0.0
    %178 = vmatpush1.xpose.msra.mxu0 0.0
    %179 = vmatprep.subr.mxu0 0.0
    %180 = vmatpush1.xpose.msra.mxu0 0.0
    %181 = vmatprep.subr.mxu0 0.0
    %182 = vmatpush1.xpose.msra.mxu0 0.0
    %183 = vmatprep.subr.mxu0 0.0
    %184 = vmatpush1.xpose.msra.mxu0 0.0
    %185 = vmatprep.subr.mxu0 0.0
    %186 = vmatpush1.xpose.msra.mxu0 0.0
    %187 = vmatprep.subr.mxu0 0.0
    %188 = vmatpush1.xpose.msra.mxu0 0.0
    %189 = vmatprep.subr.mxu0 0.0
    %190 = vmatpush1.xpose.msra.mxu0 0.0
    %191 = vmatprep.subr.mxu0 0.0
    %192 = vmatpush1.xpose.msra.mxu0 0.0
    %193 = vmatprep.subr.mxu0 0.0
    %194 = vmatpush1.xpose.msra.mxu0 0.0
    %195 = vmatprep.subr.mxu0 0.0
    %196 = vmatpush1.xpose.msra.mxu0 0.0
    %197 = vmatprep.subr.mxu0 0.0
    %198 = vmatpush1.xpose.msra.mxu0 0.0
    %199 = vmatprep.subr.mxu0 0.0
    %200 = vmatpush1.xpose.msra.mxu0 0.0
    %201 = vmatprep.subr.mxu0 0.0
    %202 = vmatpush1.xpose.msra.mxu0 0.0
    %203 = vmatprep.subr.mxu0 0.0
    %204 = vmatpush1.xpose.msra.mxu0 0.0
    %205 = vmatprep.subr.mxu0 0.0
    %206 = vmatpush1.xpose.msra.mxu0 0.0
    %207 = vmatprep.subr.mxu0 0.0
    %208 = vmatpush1.xpose.msra.mxu0 0.0
    %209 = vmatprep.subr.mxu0 0.0
    %210 = vmatpush1.xpose.msra.mxu0 0.0
    %211 = vmatprep.subr.mxu0 0.0
    %212 = vmatpush1.xpose.msra.mxu0 0.0
    %213 = vmatprep.subr.mxu0 0.0
    %214 = vmatpush1.xpose.msra.mxu0 0.0
    %215 = vmatprep.subr.mxu0 0.0
    %216 = vmatpush1.xpose.msra.mxu0 0.0
    %217 = vmatprep.subr.mxu0 0.0
    %218 = vmatpush1.xpose.msra.mxu0 0.0
    %219 = vmatprep.subr.mxu0 0.0
    %220 = vmatpush1.xpose.msra.mxu0 0.0
    %221 = vmatprep.subr.mxu0 0.0
    %222 = vmatpush1.xpose.msra.mxu0 0.0
    %223 = vmatprep.subr.mxu0 0.0
    %224 = vmatpush1.xpose.msra.mxu0 0.0
    %225 = vmatprep.subr.mxu0 0.0
    %226 = vmatpush1.xpose.msra.mxu0 0.0
    %227 = vmatprep.subr.mxu0 0.0
    %228 = vmatpush1.xpose.msra.mxu0 0.0
    %229 = vmatprep.subr.mxu0 0.0
    %230 = vmatpush1.xpose.msra.mxu0 0.0
    %231 = vmatprep.subr.mxu0 0.0
    %232 = vmatpush1.xpose.msra.mxu0 0.0
    %233 = vmatprep.subr.mxu0 0.0
    %234 = vmatpush1.xpose.msra.mxu0 0.0
    %235 = vmatprep.mubr.f32.mxu0 0.0
    %236 = vmatmul.mubr.f32.gmra.mrb[0].mxu0 %v163
    %v237 = vpop.f32.mrb[0].mxu0
    %v238 = vadd.f32 %v154, %v237
    %v239 = vpop.f32.mrb[0].mxu0
    %240 = vmatprep.mubr.f32.mxu0 0.0
    %241 = vmatmul.mubr.f32.gmra.mrb[0].mxu0 %v165
    %v242 = vpop.f32.mrb[0].mxu0
    %v243 = vadd.f32 %v155, %v242
    %v244 = vpop.f32.mrb[0].mxu0
    %245 = vdwg.mxu0
    %vm246 = vcmask 130048
    %v247 = vsel %vm246, %v238, -inf
    %248 = vmax.xlane.f32.xlu0 %v247
    %v249 = vpop.xlane.xlu0 %248
    %v250 = vsel %vm246, %v243, -inf
    %251 = vmax.xlane.f32.xlu0 %v250
    %v252 = vpop.xlane.xlu0 %251
    %v253 = vsub.f32 %v238, %v249
    %v254 = vsub.f32 %v243, %v252
    %v255 = vmul.f32 %v253, 1.442695
    %v256 = vpow.pop %v255
    %v257 = vmul.f32 %v254, 1.442695
    %v258 = vpow.pop %v257
    %v259 = vsel %vm246, %v256, 0.0
    %260 = vadd.xlane.f32.xlu0 %v259
    %v261 = vpop.xlane.xlu0 %260
    %v262 = vsel %vm246, %v258, 0.0
    %263 = vadd.xlane.f32.xlu0 %v262
    %v264 = vpop.xlane.xlu0 %263
    %v265 = vrcp.pop %v261
    %v266 = vmul.f32 %v256, %v265
    %v267 = vrcp.pop %v264
    %v268 = vmul.f32 %v258, %v267
    %269 = vrot.lane.b32.xlu0 %v146, 64
    %v270 = vpop.permute.xlu0 %269
    %271 = vrot.lane.b32.xlu0 %v151, 64
    %v272 = vpop.permute.xlu0 %271
    %v276 = vsel %vm246, %v266, 0
    %v279 = vsel %vm246, %v268, 0
    %281 = vmatprep.subr.mxu0 0.0
    %282 = vmatpush1.msra.mxu0 %v270
    %283 = vmatprep.subr.mxu0 0.0
    %284 = vmatpush1.msra.mxu0 %v272
    %285 = vmatprep.subr.mxu0 0.0
    %286 = vmatpush1.msra.mxu0 0.0
    %287 = vmatprep.subr.mxu0 0.0
    %288 = vmatpush1.msra.mxu0 0.0
    %289 = vmatprep.subr.mxu0 0.0
    %290 = vmatpush1.msra.mxu0 0.0
    %291 = vmatprep.subr.mxu0 0.0
    %292 = vmatpush1.msra.mxu0 0.0
    %293 = vmatprep.subr.mxu0 0.0
    %294 = vmatpush1.msra.mxu0 0.0
    %295 = vmatprep.subr.mxu0 0.0
    %296 = vmatpush1.msra.mxu0 0.0
    %297 = vmatprep.subr.mxu0 0.0
    %298 = vmatpush1.msra.mxu0 0.0
    %299 = vmatprep.subr.mxu0 0.0
    %300 = vmatpush1.msra.mxu0 0.0
    %301 = vmatprep.subr.mxu0 0.0
    %302 = vmatpush1.msra.mxu0 0.0
    %303 = vmatprep.subr.mxu0 0.0
    %304 = vmatpush1.msra.mxu0 0.0
    %305 = vmatprep.subr.mxu0 0.0
    %306 = vmatpush1.msra.mxu0 0.0
    %307 = vmatprep.subr.mxu0 0.0
    %308 = vmatpush1.msra.mxu0 0.0
    %309 = vmatprep.subr.mxu0 0.0
    %310 = vmatpush1.msra.mxu0 0.0
    %311 = vmatprep.subr.mxu0 0.0
    %312 = vmatpush1.msra.mxu0 0.0
    %313 = vmatprep.subr.mxu0 0.0
    %314 = vmatpush1.msra.mxu0 0.0
    %315 = vmatprep.subr.mxu0 0.0
    %316 = vmatpush1.msra.mxu0 0.0
    %317 = vmatprep.subr.mxu0 0.0
    %318 = vmatpush1.msra.mxu0 0.0
    %319 = vmatprep.subr.mxu0 0.0
    %320 = vmatpush1.msra.mxu0 0.0
    %321 = vmatprep.subr.mxu0 0.0
    %322 = vmatpush1.msra.mxu0 0.0
    %323 = vmatprep.subr.mxu0 0.0
    %324 = vmatpush1.msra.mxu0 0.0
    %325 = vmatprep.subr.mxu0 0.0
    %326 = vmatpush1.msra.mxu0 0.0
    %327 = vmatprep.subr.mxu0 0.0
    %328 = vmatpush1.msra.mxu0 0.0
    %329 = vmatprep.subr.mxu0 0.0
    %330 = vmatpush1.msra.mxu0 0.0
    %331 = vmatprep.subr.mxu0 0.0
    %332 = vmatpush1.msra.mxu0 0.0
    %333 = vmatprep.subr.mxu0 0.0
    %334 = vmatpush1.msra.mxu0 0.0
    %335 = vmatprep.subr.mxu0 0.0
    %336 = vmatpush1.msra.mxu0 0.0
    %337 = vmatprep.subr.mxu0 0.0
    %338 = vmatpush1.msra.mxu0 0.0
    %339 = vmatprep.subr.mxu0 0.0
    %340 = vmatpush1.msra.mxu0 0.0
    %341 = vmatprep.subr.mxu0 0.0
    %342 = vmatpush1.msra.mxu0 0.0
    %343 = vmatprep.subr.mxu0 0.0
    %344 = vmatpush1.msra.mxu0 0.0
    %345 = vmatprep.mubr.f32.mxu0 0.0
    %346 = vmatmul.mubr.f32.gmra.mrb[0].mxu0 %v276
    %v347 = vpop.f32.mrb[0].mxu0
    %v348 = vadd.f32 0.0, %v347
    %v349 = vpop.f32.mrb[0].mxu0
    %350 = vmatprep.mubr.f32.mxu0 0.0
    %351 = vmatmul.mubr.f32.gmra.mrb[0].mxu0 %v279
    %v352 = vpop.f32.mrb[0].mxu0
    %v353 = vadd.f32 0.0, %v352
    %v354 = vpop.f32.mrb[0].mxu0
    %355 = vdwg.mxu0
    %356 = vrot.lane.b32.xlu0 %v146, 120
    %v357 = vpop.permute.xlu0 %356
    %358 = vrot.lane.b32.xlu0 %v151, 120
    %v359 = vpop.permute.xlu0 %358
    %360 = vrot.lane.b32.xlu0 %v146, 88
    %v361 = vpop.permute.xlu0 %360
    %362 = vrot.lane.b32.xlu0 %v151, 88
    %v363 = vpop.permute.xlu0 %362
    %v364 = vsel %vm162, %v357, 0
    %v366 = vsel %vm162, %v359, 0
    %v368 = vsel %vm162, %v361, 0
    %v370 = vsel %vm162, %v363, 0
    %372 = vmatprep.subr.mxu0 0.0
    %373 = vmatpush1.xpose.msra.mxu0 %v368
    %374 = vmatprep.subr.mxu0 0.0
    %375 = vmatpush1.xpose.msra.mxu0 %v370
    %376 = vmatprep.subr.mxu0 0.0
    %377 = vmatpush1.xpose.msra.mxu0 0.0
    %378 = vmatprep.subr.mxu0 0.0
    %379 = vmatpush1.xpose.msra.mxu0 0.0
    %380 = vmatprep.subr.mxu0 0.0
    %381 = vmatpush1.xpose.msra.mxu0 0.0
    %382 = vmatprep.subr.mxu0 0.0
    %383 = vmatpush1.xpose.msra.mxu0 0.0
    %384 = vmatprep.subr.mxu0 0.0
    %385 = vmatpush1.xpose.msra.mxu0 0.0
    %386 = vmatprep.subr.mxu0 0.0
    %387 = vmatpush1.xpose.msra.mxu0 0.0
    %388 = vmatprep.subr.mxu0 0.0
    %389 = vmatpush1.xpose.msra.mxu0 0.0
    %390 = vmatprep.subr.mxu0 0.0
    %391 = vmatpush1.xpose.msra.mxu0 0.0
    %392 = vmatprep.subr.mxu0 0.0
    %393 = vmatpush1.xpose.msra.mxu0 0.0
    %394 = vmatprep.subr.mxu0 0.0
    %395 = vmatpush1.xpose.msra.mxu0 0.0
    %396 = vmatprep.subr.mxu0 0.0
    %397 = vmatpush1.xpose.msra.mxu0 0.0
    %398 = vmatprep.subr.mxu0 0.0
    %399 = vmatpush1.xpose.msra.mxu0 0.0
    %400 = vmatprep.subr.mxu0 0.0
    %401 = vmatpush1.xpose.msra.mxu0 0.0
    %402 = vmatprep.subr.mxu0 0.0
    %403 = vmatpush1.xpose.msra.mxu0 0.0
    %404 = vmatprep.subr.mxu0 0.0
    %405 = vmatpush1.xpose.msra.mxu0 0.0
    %406 = vmatprep.subr.mxu0 0.0
    %407 = vmatpush1.xpose.msra.mxu0 0.0
    %408 = vmatprep.subr.mxu0 0.0
    %409 = vmatpush1.xpose.msra.mxu0 0.0
    %410 = vmatprep.subr.mxu0 0.0
    %411 = vmatpush1.xpose.msra.mxu0 0.0
    %412 = vmatprep.subr.mxu0 0.0
    %413 = vmatpush1.xpose.msra.mxu0 0.0
    %414 = vmatprep.subr.mxu0 0.0
    %415 = vmatpush1.xpose.msra.mxu0 0.0
    %416 = vmatprep.subr.mxu0 0.0
    %417 = vmatpush1.xpose.msra.mxu0 0.0
    %418 = vmatprep.subr.mxu0 0.0
    %419 = vmatpush1.xpose.msra.mxu0 0.0
    %420 = vmatprep.subr.mxu0 0.0
    %421 = vmatpush1.xpose.msra.mxu0 0.0
    %422 = vmatprep.subr.mxu0 0.0
    %423 = vmatpush1.xpose.msra.mxu0 0.0
    %424 = vmatprep.subr.mxu0 0.0
    %425 = vmatpush1.xpose.msra.mxu0 0.0
    %426 = vmatprep.subr.mxu0 0.0
    %427 = vmatpush1.xpose.msra.mxu0 0.0
    %428 = vmatprep.subr.mxu0 0.0
    %429 = vmatpush1.xpose.msra.mxu0 0.0
    %430 = vmatprep.subr.mxu0 0.0
    %431 = vmatpush1.xpose.msra.mxu0 0.0
    %432 = vmatprep.subr.mxu0 0.0
    %433 = vmatpush1.xpose.msra.mxu0 0.0
    %434 = vmatprep.subr.mxu0 0.0
    %435 = vmatpush1.xpose.msra.mxu0 0.0
    %436 = vmatprep.mubr.f32.mxu0 0.0
    %437 = vmatmul.mubr.f32.gmra.mrb[0].mxu0 %v364
    %v438 = vpop.f32.mrb[0].mxu0
    %v439 = vadd.f32 %v154, %v438
    %v440 = vpop.f32.mrb[0].mxu0
    %441 = vmatprep.mubr.f32.mxu0 0.0
    %442 = vmatmul.mubr.f32.gmra.mrb[0].mxu0 %v366
    %v443 = vpop.f32.mrb[0].mxu0
    %v444 = vadd.f32 %v155, %v443
    %v445 = vpop.f32.mrb[0].mxu0
    %446 = vdwg.mxu0
    %v447 = vsel %vm246, %v439, -inf
    %448 = vmax.xlane.f32.xlu0 %v447
    %v449 = vpop.xlane.xlu0 %448
    %v450 = vsel %vm246, %v444, -inf
    %451 = vmax.xlane.f32.xlu0 %v450
    %v452 = vpop.xlane.xlu0 %451
    %v453 = vsub.f32 %v439, %v449
    %v454 = vsub.f32 %v444, %v452
    %v455 = vmul.f32 %v453, 1.442695
    %v456 = vpow.pop %v455
    %v457 = vmul.f32 %v454, 1.442695
    %v458 = vpow.pop %v457
    %v459 = vsel %vm246, %v456, 0.0
    %460 = vadd.xlane.f32.xlu0 %v459
    %v461 = vpop.xlane.xlu0 %460
    %v462 = vsel %vm246, %v458, 0.0
    %463 = vadd.xlane.f32.xlu0 %v462
    %v464 = vpop.xlane.xlu0 %463
    %v465 = vrcp.pop %v461
    %v466 = vmul.f32 %v456, %v465
    %v467 = vrcp.pop %v464
    %v468 = vmul.f32 %v458, %v467
    %469 = vrot.lane.b32.xlu0 %v146, 56
    %v470 = vpop.permute.xlu0 %469
    %471 = vrot.lane.b32.xlu0 %v151, 56
    %v472 = vpop.permute.xlu0 %471
    %v476 = vsel %vm246, %v466, 0
    %v479 = vsel %vm246, %v468, 0
    %481 = vmatprep.subr.mxu0 0.0
    %482 = vmatpush1.msra.mxu0 %v470
    %483 = vmatprep.subr.mxu0 0.0
    %484 = vmatpush1.msra.mxu0 %v472
    %485 = vmatprep.subr.mxu0 0.0
    %486 = vmatpush1.msra.mxu0 0.0
    %487 = vmatprep.subr.mxu0 0.0
    %488 = vmatpush1.msra.mxu0 0.0
    %489 = vmatprep.subr.mxu0 0.0
    %490 = vmatpush1.msra.mxu0 0.0
    %491 = vmatprep.subr.mxu0 0.0
    %492 = vmatpush1.msra.mxu0 0.0
    %493 = vmatprep.subr.mxu0 0.0
    %494 = vmatpush1.msra.mxu0 0.0
    %495 = vmatprep.subr.mxu0 0.0
    %496 = vmatpush1.msra.mxu0 0.0
    %497 = vmatprep.subr.mxu0 0.0
    %498 = vmatpush1.msra.mxu0 0.0
    %499 = vmatprep.subr.mxu0 0.0
    %500 = vmatpush1.msra.mxu0 0.0
    %501 = vmatprep.subr.mxu0 0.0
    %502 = vmatpush1.msra.mxu0 0.0
    %503 = vmatprep.subr.mxu0 0.0
    %504 = vmatpush1.msra.mxu0 0.0
    %505 = vmatprep.subr.mxu0 0.0
    %506 = vmatpush1.msra.mxu0 0.0
    %507 = vmatprep.subr.mxu0 0.0
    %508 = vmatpush1.msra.mxu0 0.0
    %509 = vmatprep.subr.mxu0 0.0
    %510 = vmatpush1.msra.mxu0 0.0
    %511 = vmatprep.subr.mxu0 0.0
    %512 = vmatpush1.msra.mxu0 0.0
    %513 = vmatprep.subr.mxu0 0.0
    %514 = vmatpush1.msra.mxu0 0.0
    %515 = vmatprep.subr.mxu0 0.0
    %516 = vmatpush1.msra.mxu0 0.0
    %517 = vmatprep.subr.mxu0 0.0
    %518 = vmatpush1.msra.mxu0 0.0
    %519 = vmatprep.subr.mxu0 0.0
    %520 = vmatpush1.msra.mxu0 0.0
    %521 = vmatprep.subr.mxu0 0.0
    %522 = vmatpush1.msra.mxu0 0.0
    %523 = vmatprep.subr.mxu0 0.0
    %524 = vmatpush1.msra.mxu0 0.0
    %525 = vmatprep.subr.mxu0 0.0
    %526 = vmatpush1.msra.mxu0 0.0
    %527 = vmatprep.subr.mxu0 0.0
    %528 = vmatpush1.msra.mxu0 0.0
    %529 = vmatprep.subr.mxu0 0.0
    %530 = vmatpush1.msra.mxu0 0.0
    %531 = vmatprep.subr.mxu0 0.0
    %532 = vmatpush1.msra.mxu0 0.0
    %533 = vmatprep.subr.mxu0 0.0
    %534 = vmatpush1.msra.mxu0 0.0
    %535 = vmatprep.subr.mxu0 0.0
    %536 = vmatpush1.msra.mxu0 0.0
    %537 = vmatprep.subr.mxu0 0.0
    %538 = vmatpush1.msra.mxu0 0.0
    %539 = vmatprep.subr.mxu0 0.0
    %540 = vmatpush1.msra.mxu0 0.0
    %541 = vmatprep.subr.mxu0 0.0
    %542 = vmatpush1.msra.mxu0 0.0
    %543 = vmatprep.subr.mxu0 0.0
    %544 = vmatpush1.msra.mxu0 0.0
    %545 = vmatprep.mubr.f32.mxu0 0.0
    %546 = vmatmul.mubr.f32.gmra.mrb[0].mxu0 %v476
    %v547 = vpop.f32.mrb[0].mxu0
    %v548 = vadd.f32 0.0, %v547
    %v549 = vpop.f32.mrb[0].mxu0
    %550 = vmatprep.mubr.f32.mxu0 0.0
    %551 = vmatmul.mubr.f32.gmra.mrb[0].mxu0 %v479
    %v552 = vpop.f32.mrb[0].mxu0
    %v553 = vadd.f32 0.0, %v552
    %v554 = vpop.f32.mrb[0].mxu0
    %555 = vdwg.mxu0
    %556 = vrot.lane.b32.xlu0 %v146, 112
    %v557 = vpop.permute.xlu0 %556
    %558 = vrot.lane.b32.xlu0 %v151, 112
    %v559 = vpop.permute.xlu0 %558
    %560 = vrot.lane.b32.xlu0 %v146, 80
    %v561 = vpop.permute.xlu0 %560
    %562 = vrot.lane.b32.xlu0 %v151, 80
    %v563 = vpop.permute.xlu0 %562
    %v564 = vsel %vm162, %v557, 0
    %v566 = vsel %vm162, %v559, 0
    %v568 = vsel %vm162, %v561, 0
    %v570 = vsel %vm162, %v563, 0
    %572 = vmatprep.subr.mxu0 0.0
    %573 = vmatpush1.xpose.msra.mxu0 %v568
    %574 = vmatprep.subr.mxu0 0.0
    %575 = vmatpush1.xpose.msra.mxu0 %v570
    %576 = vmatprep.subr.mxu0 0.0
    %577 = vmatpush1.xpose.msra.mxu0 0.0
    %578 = vmatprep.subr.mxu0 0.0
    %579 = vmatpush1.xpose.msra.mxu0 0.0
    %580 = vmatprep.subr.mxu0 0.0
    %581 = vmatpush1.xpose.msra.mxu0 0.0
    %582 = vmatprep.subr.mxu0 0.0
    %583 = vmatpush1.xpose.msra.mxu0 0.0
    %584 = vmatprep.subr.mxu0 0.0
    %585 = vmatpush1.xpose.msra.mxu0 0.0
    %586 = vmatprep.subr.mxu0 0.0
    %587 = vmatpush1.xpose.msra.mxu0 0.0
    %588 = vmatprep.subr.mxu0 0.0
    %589 = vmatpush1.xpose.msra.mxu0 0.0
    %590 = vmatprep.subr.mxu0 0.0
    %591 = vmatpush1.xpose.msra.mxu0 0.0
    %592 = vmatprep.subr.mxu0 0.0
    %593 = vmatpush1.xpose.msra.mxu0 0.0
    %594 = vmatprep.subr.mxu0 0.0
    %595 = vmatpush1.xpose.msra.mxu0 0.0
    %596 = vmatprep.subr.mxu0 0.0
    %597 = vmatpush1.xpose.msra.mxu0 0.0
    %598 = vmatprep.subr.mxu0 0.0
    %599 = vmatpush1.xpose.msra.mxu0 0.0
    %600 = vmatprep.subr.mxu0 0.0
    %601 = vmatpush1.xpose.msra.mxu0 0.0
    %602 = vmatprep.subr.mxu0 0.0
    %603 = vmatpush1.xpose.msra.mxu0 0.0
    %604 = vmatprep.subr.mxu0 0.0
    %605 = vmatpush1.xpose.msra.mxu0 0.0
    %606 = vmatprep.subr.mxu0 0.0
    %607 = vmatpush1.xpose.msra.mxu0 0.0
    %608 = vmatprep.subr.mxu0 0.0
    %609 = vmatpush1.xpose.msra.mxu0 0.0
    %610 = vmatprep.subr.mxu0 0.0
    %611 = vmatpush1.xpose.msra.mxu0 0.0
    %612 = vmatprep.subr.mxu0 0.0
    %613 = vmatpush1.xpose.msra.mxu0 0.0
    %614 = vmatprep.subr.mxu0 0.0
    %615 = vmatpush1.xpose.msra.mxu0 0.0
    %616 = vmatprep.subr.mxu0 0.0
    %617 = vmatpush1.xpose.msra.mxu0 0.0
    %618 = vmatprep.subr.mxu0 0.0
    %619 = vmatpush1.xpose.msra.mxu0 0.0
    %620 = vmatprep.subr.mxu0 0.0
    %621 = vmatpush1.xpose.msra.mxu0 0.0
    %622 = vmatprep.subr.mxu0 0.0
    %623 = vmatpush1.xpose.msra.mxu0 0.0
    %624 = vmatprep.subr.mxu0 0.0
    %625 = vmatpush1.xpose.msra.mxu0 0.0
    %626 = vmatprep.subr.mxu0 0.0
    %627 = vmatpush1.xpose.msra.mxu0 0.0
    %628 = vmatprep.subr.mxu0 0.0
    %629 = vmatpush1.xpose.msra.mxu0 0.0
    %630 = vmatprep.subr.mxu0 0.0
    %631 = vmatpush1.xpose.msra.mxu0 0.0
    %632 = vmatprep.subr.mxu0 0.0
    %633 = vmatpush1.xpose.msra.mxu0 0.0
    %634 = vmatprep.subr.mxu0 0.0
    %635 = vmatpush1.xpose.msra.mxu0 0.0
    %636 = vmatprep.mubr.f32.mxu0 0.0
    %637 = vmatmul.mubr.f32.gmra.mrb[0].mxu0 %v564
    %v638 = vpop.f32.mrb[0].mxu0
    %v639 = vadd.f32 %v154, %v638
    %v640 = vpop.f32.mrb[0].mxu0
    %641 = vmatprep.mubr.f32.mxu0 0.0
    %642 = vmatmul.mubr.f32.gmra.mrb[0].mxu0 %v566
    %v643 = vpop.f32.mrb[0].mxu0
    %v644 = vadd.f32 %v155, %v643
    %v645 = vpop.f32.mrb[0].mxu0
    %646 = vdwg.mxu0
    %v647 = vsel %vm246, %v639, -inf
    %648 = vmax.xlane.f32.xlu0 %v647
    %v649 = vpop.xlane.xlu0 %648
    %v650 = vsel %vm246, %v644, -inf
    %651 = vmax.xlane.f32.xlu0 %v650
    %v652 = vpop.xlane.xlu0 %651
    %v653 = vsub.f32 %v639, %v649
    %v654 = vsub.f32 %v644, %v652
    %v655 = vmul.f32 %v653, 1.442695
    %v656 = vpow.pop %v655
    %v657 = vmul.f32 %v654, 1.442695
    %v658 = vpow.pop %v657
    %v659 = vsel %vm246, %v656, 0.0
    %660 = vadd.xlane.f32.xlu0 %v659
    %v661 = vpop.xlane.xlu0 %660
    %v662 = vsel %vm246, %v658, 0.0
    %663 = vadd.xlane.f32.xlu0 %v662
    %v664 = vpop.xlane.xlu0 %663
    %v665 = vrcp.pop %v661
    %v666 = vmul.f32 %v656, %v665
    %v667 = vrcp.pop %v664
    %v668 = vmul.f32 %v658, %v667
    %669 = vrot.lane.b32.xlu0 %v146, 48
    %v670 = vpop.permute.xlu0 %669
    %671 = vrot.lane.b32.xlu0 %v151, 48
    %v672 = vpop.permute.xlu0 %671
    %v676 = vsel %vm246, %v666, 0
    %v679 = vsel %vm246, %v668, 0
    %681 = vmatprep.subr.mxu0 0.0
    %682 = vmatpush1.msra.mxu0 %v670
    %683 = vmatprep.subr.mxu0 0.0
    %684 = vmatpush1.msra.mxu0 %v672
    %685 = vmatprep.subr.mxu0 0.0
    %686 = vmatpush1.msra.mxu0 0.0
    %687 = vmatprep.subr.mxu0 0.0
    %688 = vmatpush1.msra.mxu0 0.0
    %689 = vmatprep.subr.mxu0 0.0
    %690 = vmatpush1.msra.mxu0 0.0
    %691 = vmatprep.subr.mxu0 0.0
    %692 = vmatpush1.msra.mxu0 0.0
    %693 = vmatprep.subr.mxu0 0.0
    %694 = vmatpush1.msra.mxu0 0.0
    %695 = vmatprep.subr.mxu0 0.0
    %696 = vmatpush1.msra.mxu0 0.0
    %697 = vmatprep.subr.mxu0 0.0
    %698 = vmatpush1.msra.mxu0 0.0
    %699 = vmatprep.subr.mxu0 0.0
    %700 = vmatpush1.msra.mxu0 0.0
    %701 = vmatprep.subr.mxu0 0.0
    %702 = vmatpush1.msra.mxu0 0.0
    %703 = vmatprep.subr.mxu0 0.0
    %704 = vmatpush1.msra.mxu0 0.0
    %705 = vmatprep.subr.mxu0 0.0
    %706 = vmatpush1.msra.mxu0 0.0
    %707 = vmatprep.subr.mxu0 0.0
    %708 = vmatpush1.msra.mxu0 0.0
    %709 = vmatprep.subr.mxu0 0.0
    %710 = vmatpush1.msra.mxu0 0.0
    %711 = vmatprep.subr.mxu0 0.0
    %712 = vmatpush1.msra.mxu0 0.0
    %713 = vmatprep.subr.mxu0 0.0
    %714 = vmatpush1.msra.mxu0 0.0
    %715 = vmatprep.subr.mxu0 0.0
    %716 = vmatpush1.msra.mxu0 0.0
    %717 = vmatprep.subr.mxu0 0.0
    %718 = vmatpush1.msra.mxu0 0.0
    %719 = vmatprep.subr.mxu0 0.0
    %720 = vmatpush1.msra.mxu0 0.0
    %721 = vmatprep.subr.mxu0 0.0
    %722 = vmatpush1.msra.mxu0 0.0
    %723 = vmatprep.subr.mxu0 0.0
    %724 = vmatpush1.msra.mxu0 0.0
    %725 = vmatprep.subr.mxu0 0.0
    %726 = vmatpush1.msra.mxu0 0.0
    %727 = vmatprep.subr.mxu0 0.0
    %728 = vmatpush1.msra.mxu0 0.0
    %729 = vmatprep.subr.mxu0 0.0
    %730 = vmatpush1.msra.mxu0 0.0
    %731 = vmatprep.subr.mxu0 0.0
    %732 = vmatpush1.msra.mxu0 0.0
    %733 = vmatprep.subr.mxu0 0.0
    %734 = vmatpush1.msra.mxu0 0.0
    %735 = vmatprep.subr.mxu0 0.0
    %736 = vmatpush1.msra.mxu0 0.0
    %737 = vmatprep.subr.mxu0 0.0
    %738 = vmatpush1.msra.mxu0 0.0
    %739 = vmatprep.subr.mxu0 0.0
    %740 = vmatpush1.msra.mxu0 0.0
    %741 = vmatprep.subr.mxu0 0.0
    %742 = vmatpush1.msra.mxu0 0.0
    %743 = vmatprep.subr.mxu0 0.0
    %744 = vmatpush1.msra.mxu0 0.0
    %745 = vmatprep.mubr.f32.mxu0 0.0
    %746 = vmatmul.mubr.f32.gmra.mrb[0].mxu0 %v676
    %v747 = vpop.f32.mrb[0].mxu0
    %v748 = vadd.f32 0.0, %v747
    %v749 = vpop.f32.mrb[0].mxu0
    %750 = vmatprep.mubr.f32.mxu0 0.0
    %751 = vmatmul.mubr.f32.gmra.mrb[0].mxu0 %v679
    %v752 = vpop.f32.mrb[0].mxu0
    %v753 = vadd.f32 0.0, %v752
    %v754 = vpop.f32.mrb[0].mxu0
    %755 = vdwg.mxu0
    %756 = vrot.lane.b32.xlu0 %v146, 104
    %v757 = vpop.permute.xlu0 %756
    %758 = vrot.lane.b32.xlu0 %v151, 104
    %v759 = vpop.permute.xlu0 %758
    %760 = vrot.lane.b32.xlu0 %v146, 72
    %v761 = vpop.permute.xlu0 %760
    %762 = vrot.lane.b32.xlu0 %v151, 72
    %v763 = vpop.permute.xlu0 %762
    %v764 = vsel %vm162, %v757, 0
    %v766 = vsel %vm162, %v759, 0
    %v768 = vsel %vm162, %v761, 0
    %v770 = vsel %vm162, %v763, 0
    %772 = vmatprep.subr.mxu0 0.0
    %773 = vmatpush1.xpose.msra.mxu0 %v768
    %774 = vmatprep.subr.mxu0 0.0
    %775 = vmatpush1.xpose.msra.mxu0 %v770
    %776 = vmatprep.subr.mxu0 0.0
    %777 = vmatpush1.xpose.msra.mxu0 0.0
    %778 = vmatprep.subr.mxu0 0.0
    %779 = vmatpush1.xpose.msra.mxu0 0.0
    %780 = vmatprep.subr.mxu0 0.0
    %781 = vmatpush1.xpose.msra.mxu0 0.0
    %782 = vmatprep.subr.mxu0 0.0
    %783 = vmatpush1.xpose.msra.mxu0 0.0
    %784 = vmatprep.subr.mxu0 0.0
    %785 = vmatpush1.xpose.msra.mxu0 0.0
    %786 = vmatprep.subr.mxu0 0.0
    %787 = vmatpush1.xpose.msra.mxu0 0.0
    %788 = vmatprep.subr.mxu0 0.0
    %789 = vmatpush1.xpose.msra.mxu0 0.0
    %790 = vmatprep.subr.mxu0 0.0
    %791 = vmatpush1.xpose.msra.mxu0 0.0
    %792 = vmatprep.subr.mxu0 0.0
    %793 = vmatpush1.xpose.msra.mxu0 0.0
    %794 = vmatprep.subr.mxu0 0.0
    %795 = vmatpush1.xpose.msra.mxu0 0.0
    %796 = vmatprep.subr.mxu0 0.0
    %797 = vmatpush1.xpose.msra.mxu0 0.0
    %798 = vmatprep.subr.mxu0 0.0
    %799 = vmatpush1.xpose.msra.mxu0 0.0
    %800 = vmatprep.subr.mxu0 0.0
    %801 = vmatpush1.xpose.msra.mxu0 0.0
    %802 = vmatprep.subr.mxu0 0.0
    %803 = vmatpush1.xpose.msra.mxu0 0.0
    %804 = vmatprep.subr.mxu0 0.0
    %805 = vmatpush1.xpose.msra.mxu0 0.0
    %806 = vmatprep.subr.mxu0 0.0
    %807 = vmatpush1.xpose.msra.mxu0 0.0
    %808 = vmatprep.subr.mxu0 0.0
    %809 = vmatpush1.xpose.msra.mxu0 0.0
    %810 = vmatprep.subr.mxu0 0.0
    %811 = vmatpush1.xpose.msra.mxu0 0.0
    %812 = vmatprep.subr.mxu0 0.0
    %813 = vmatpush1.xpose.msra.mxu0 0.0
    %814 = vmatprep.subr.mxu0 0.0
    %815 = vmatpush1.xpose.msra.mxu0 0.0
    %816 = vmatprep.subr.mxu0 0.0
    %817 = vmatpush1.xpose.msra.mxu0 0.0
    %818 = vmatprep.subr.mxu0 0.0
    %819 = vmatpush1.xpose.msra.mxu0 0.0
    %820 = vmatprep.subr.mxu0 0.0
    %821 = vmatpush1.xpose.msra.mxu0 0.0
    %822 = vmatprep.subr.mxu0 0.0
    %823 = vmatpush1.xpose.msra.mxu0 0.0
    %824 = vmatprep.subr.mxu0 0.0
    %825 = vmatpush1.xpose.msra.mxu0 0.0
    %826 = vmatprep.subr.mxu0 0.0
    %827 = vmatpush1.xpose.msra.mxu0 0.0
    %828 = vmatprep.subr.mxu0 0.0
    %829 = vmatpush1.xpose.msra.mxu0 0.0
    %830 = vmatprep.subr.mxu0 0.0
    %831 = vmatpush1.xpose.msra.mxu0 0.0
    %832 = vmatprep.subr.mxu0 0.0
    %833 = vmatpush1.xpose.msra.mxu0 0.0
    %834 = vmatprep.subr.mxu0 0.0
    %835 = vmatpush1.xpose.msra.mxu0 0.0
    %836 = vmatprep.mubr.f32.mxu0 0.0
    %837 = vmatmul.mubr.f32.gmra.mrb[0].mxu0 %v764
    %v838 = vpop.f32.mrb[0].mxu0
    %v839 = vadd.f32 %v154, %v838
    %v840 = vpop.f32.mrb[0].mxu0
    %841 = vmatprep.mubr.f32.mxu0 0.0
    %842 = vmatmul.mubr.f32.gmra.mrb[0].mxu0 %v766
    %v843 = vpop.f32.mrb[0].mxu0
    %v844 = vadd.f32 %v155, %v843
    %v845 = vpop.f32.mrb[0].mxu0
    %846 = vdwg.mxu0
    %v847 = vsel %vm246, %v839, -inf
    %848 = vmax.xlane.f32.xlu0 %v847
    %v849 = vpop.xlane.xlu0 %848
    %v850 = vsel %vm246, %v844, -inf
    %851 = vmax.xlane.f32.xlu0 %v850
    %v852 = vpop.xlane.xlu0 %851
    %v853 = vsub.f32 %v839, %v849
    %v854 = vsub.f32 %v844, %v852
    %v855 = vmul.f32 %v853, 1.442695
    %v856 = vpow.pop %v855
    %v857 = vmul.f32 %v854, 1.442695
    %v858 = vpow.pop %v857
    %v859 = vsel %vm246, %v856, 0.0
    %860 = vadd.xlane.f32.xlu0 %v859
    %v861 = vpop.xlane.xlu0 %860
    %v862 = vsel %vm246, %v858, 0.0
    %863 = vadd.xlane.f32.xlu0 %v862
    %v864 = vpop.xlane.xlu0 %863
    %v865 = vrcp.pop %v861
    %v866 = vmul.f32 %v856, %v865
    %v867 = vrcp.pop %v864
    %v868 = vmul.f32 %v858, %v867
    %869 = vrot.lane.b32.xlu0 %v146, 40
    %v870 = vpop.permute.xlu0 %869
    %871 = vrot.lane.b32.xlu0 %v151, 40
    %v872 = vpop.permute.xlu0 %871
    %v876 = vsel %vm246, %v866, 0
    %v879 = vsel %vm246, %v868, 0
    %881 = vmatprep.subr.mxu0 0.0
    %882 = vmatpush1.msra.mxu0 %v870
    %883 = vmatprep.subr.mxu0 0.0
    %884 = vmatpush1.msra.mxu0 %v872
    %885 = vmatprep.subr.mxu0 0.0
    %886 = vmatpush1.msra.mxu0 0.0
    %887 = vmatprep.subr.mxu0 0.0
    %888 = vmatpush1.msra.mxu0 0.0
    %889 = vmatprep.subr.mxu0 0.0
    %890 = vmatpush1.msra.mxu0 0.0
    %891 = vmatprep.subr.mxu0 0.0
    %892 = vmatpush1.msra.mxu0 0.0
    %893 = vmatprep.subr.mxu0 0.0
    %894 = vmatpush1.msra.mxu0 0.0
    %895 = vmatprep.subr.mxu0 0.0
    %896 = vmatpush1.msra.mxu0 0.0
    %897 = vmatprep.subr.mxu0 0.0
    %898 = vmatpush1.msra.mxu0 0.0
    %899 = vmatprep.subr.mxu0 0.0
    %900 = vmatpush1.msra.mxu0 0.0
    %901 = vmatprep.subr.mxu0 0.0
    %902 = vmatpush1.msra.mxu0 0.0
    %903 = vmatprep.subr.mxu0 0.0
    %904 = vmatpush1.msra.mxu0 0.0
    %905 = vmatprep.subr.mxu0 0.0
    %906 = vmatpush1.msra.mxu0 0.0
    %907 = vmatprep.subr.mxu0 0.0
    %908 = vmatpush1.msra.mxu0 0.0
    %909 = vmatprep.subr.mxu0 0.0
    %910 = vmatpush1.msra.mxu0 0.0
    %911 = vmatprep.subr.mxu0 0.0
    %912 = vmatpush1.msra.mxu0 0.0
    %913 = vmatprep.subr.mxu0 0.0
    %914 = vmatpush1.msra.mxu0 0.0
    %915 = vmatprep.subr.mxu0 0.0
    %916 = vmatpush1.msra.mxu0 0.0
    %917 = vmatprep.subr.mxu0 0.0
    %918 = vmatpush1.msra.mxu0 0.0
    %919 = vmatprep.subr.mxu0 0.0
    %920 = vmatpush1.msra.mxu0 0.0
    %921 = vmatprep.subr.mxu0 0.0
    %922 = vmatpush1.msra.mxu0 0.0
    %923 = vmatprep.subr.mxu0 0.0
    %924 = vmatpush1.msra.mxu0 0.0
    %925 = vmatprep.subr.mxu0 0.0
    %926 = vmatpush1.msra.mxu0 0.0
    %927 = vmatprep.subr.mxu0 0.0
    %928 = vmatpush1.msra.mxu0 0.0
    %929 = vmatprep.subr.mxu0 0.0
    %930 = vmatpush1.msra.mxu0 0.0
    %931 = vmatprep.subr.mxu0 0.0
    %932 = vmatpush1.msra.mxu0 0.0
    %933 = vmatprep.subr.mxu0 0.0
    %934 = vmatpush1.msra.mxu0 0.0
    %935 = vmatprep.subr.mxu0 0.0
    %936 = vmatpush1.msra.mxu0 0.0
    %937 = vmatprep.subr.mxu0 0.0
    %938 = vmatpush1.msra.mxu0 0.0
    %939 = vmatprep.subr.mxu0 0.0
    %940 = vmatpush1.msra.mxu0 0.0
    %941 = vmatprep.subr.mxu0 0.0
    %942 = vmatpush1.msra.mxu0 0.0
    %943 = vmatprep.subr.mxu0 0.0
    %944 = vmatpush1.msra.mxu0 0.0
    %945 = vmatprep.mubr.f32.mxu0 0.0
    %946 = vmatmul.mubr.f32.gmra.mrb[0].mxu0 %v876
    %v947 = vpop.f32.mrb[0].mxu0
    %v948 = vadd.f32 0.0, %v947
    %v949 = vpop.f32.mrb[0].mxu0
    %950 = vmatprep.mubr.f32.mxu0 0.0
    %951 = vmatmul.mubr.f32.gmra.mrb[0].mxu0 %v879
    %v952 = vpop.f32.mrb[0].mxu0
    %v953 = vadd.f32 0.0, %v952
    %v954 = vpop.f32.mrb[0].mxu0
    %955 = vdwg.mxu0
    %958 = vrot.lane.b32.xlu0 %v548, 8
    %v959 = vpop.permute.xlu0 %958
    %960 = vrot.lane.b32.xlu0 %v553, 8
    %v961 = vpop.permute.xlu0 %960
    %966 = vrot.lane.b32.xlu0 %v748, 16
    %v967 = vpop.permute.xlu0 %966
    %968 = vrot.lane.b32.xlu0 %v753, 16
    %v969 = vpop.permute.xlu0 %968
    %974 = vrot.lane.b32.xlu0 %v948, 24
    %v975 = vpop.permute.xlu0 %974
    %976 = vrot.lane.b32.xlu0 %v953, 24
    %v977 = vpop.permute.xlu0 %976
    %v980 = vsel %vm162, %v348, %v959
    %v981 = vsel %vm162, %v353, %v961
    %v982 = vsel %vm246, %v980, %v967
    %v983 = vsel %vm246, %v981, %v969
    %vm984 = vcmask 195584
    %v985 = vsel %vm984, %v982, %v975
    %v986 = vsel %vm984, %v983, %v977
    %987 = vst.msk [vmem:[#allocation8] sm:$0xff] %vm72, %v985
    %988 = vst.msk [vmem:[#allocation8 + $0x8] sm:$0xff] %vm72, %v986
    // Predicated region
    $region30: #{tpu_custom_call.1} parent=1 // pred_check
      _
    $region31: #{tpu_custom_call.1} parent=1 // pred_check_branch
      %990 = sbr.rel (0) target = $region33
    $region32: #{tpu_custom_call.1} parent=1 // pred_region
      %s992 = ssub.s32 256, 256
      %993 = vsyncadd [#allocation4], %s992
      %s994 = sshll.u32 [#allocation8], 4
      %s995 = int_to_ptr.vmem [resolvable:$true] %s994
      %1000 = dma.vmem_to_hbm [thread:$0]  %s995, 256, %s4, [#allocation4], 128, 128, 8
    $region33: #{tpu_custom_call.1} parent=1 // pred_fallthru
      _
    // Predicated region
    $region34: #{tpu_custom_call.1} parent=1 // pred_check
      _
    $region35: #{tpu_custom_call.1} parent=1 // pred_check_branch
      %1002 = sbr.rel (0) target = $region37
    $region36: #{tpu_custom_call.1} parent=1 // pred_region
      %1003 = dma.done [#allocation4], 256
    $region37: #{tpu_custom_call.1} parent=1 // pred_fallthru
      _
    %1004 = vsyncpa [#allocation3], 1
    %1005 = vsyncpa [#allocation6], 1
    %1006 = vsyncpa [#allocation4], 1

</llo_original>
